<compile_context>
chip_gen: v7x
topology: tpu7x:2x2x1
jax: 0.10.0
libtpu: 0.0.40
codegen_flags: <defaults>
</compile_context>

<pallas_src>
import math
import jax
import jax.numpy as jnp
from jax.experimental import pallas as pl
from jax.experimental.pallas import tpu as pltpu

EPS = 1e-5    # nn.BatchNorm1d default eps
LANE = 128    # TPU lane width


def _round_up(v, m):
    return ((v + m - 1) // m) * m


def _bn_train(y, gb):
    """Training-mode BatchNorm1d on [N, D] f32 y.

    gb: [2, D] packed (row 0 = gamma, row 1 = beta).  Single-pass stats + folded affine:
    scale = gamma * rsqrt(var + eps), shift = beta - mean * scale.  Padded columns have
    y == 0 and gamma == 0, so scale == 0 and the padded lanes stay exactly zero.
    """
    inv_n = 1.0 / y.shape[0]
    s1 = jnp.sum(y, axis=0, keepdims=True)
    s2 = jnp.sum(y * y, axis=0, keepdims=True)
    mean = s1 * inv_n
    var = jnp.maximum(s2 * inv_n - mean * mean, 0.0)   # clamp f32 cancellation
    gamma = gb[0:1, :]
    beta = gb[1:2, :]
    scale = gamma * jax.lax.rsqrt(var + EPS)
    shift = beta - mean * scale
    return y * scale + shift


def _make_kernel(n_layers, alpha, residual_first, residual_last):
    """Grid-over-layers kernel for n_layers >= 2.  One grid step == one layer."""
    L = n_layers

    def kernel(a_ref, x_ref, wf_ref, gbf_ref, wm_ref, gbm_ref, wl_ref, gbl_ref,
               o_ref, xs_ref, h0_ref):
        l = pl.program_id(0)
        a = a_ref[0]                                   # PReLU slope, scalar from SMEM

        # --- layer 0: Dense(in -> hidden) ---
        @pl.when(l == 0)
        def _first():
            x = x_ref[...]
            y = jnp.dot(x.astype(jnp.bfloat16), wf_ref[...],
                        preferred_element_type=jnp.float32)
            y = _bn_train(y, gbf_ref[...])
            if residual_first:                         # only when in_feats == hidden
                y = y + x
            xs_ref[...] = y
            h0_ref[...] = y                            # GCNII anchor, resident in VMEM

        # --- layers 1..L-2: GraphConvolution(hidden -> hidden) ---
        @pl.when(jnp.logical_and(l > 0, l < L - 1))
        def _mid():
            x = xs_ref[...]
            xa = jnp.maximum(x, a * x)                 # PReLU (0<=a<=1); dropout p=0 -> id
            support = (1.0 - alpha) * xa + alpha * h0_ref[...]
            y = jnp.dot(support.astype(jnp.bfloat16), wm_ref[0],
                        preferred_element_type=jnp.float32)
            y = _bn_train(y, gbm_ref[0])
            xs_ref[...] = y + xa                       # in == out for GCN layers

        # --- layer L-1: Dense(hidden -> out) ---
        @pl.when(l == L - 1)
        def _last():
            x = xs_ref[...]
            xa = jnp.maximum(x, a * x)                 # PReLU; dropout p=0 -> identity
            y = jnp.dot(xa.astype(jnp.bfloat16), wl_ref[...],
                        preferred_element_type=jnp.float32)
            y = _bn_train(y, gbl_ref[...])
            if residual_last:                          # only when hidden == out_feats
                y = y + xa
            o_ref[...] = y

    return kernel


def _make_kernel_single(residual):
    """n_layers == 1: single Dense layer (no PReLU / dropout applied by the module)."""
    def kernel(x_ref, w_ref, gb_ref, o_ref):
        x = x_ref[...]
        y = jnp.dot(x.astype(jnp.bfloat16), w_ref[...],
                    preferred_element_type=jnp.float32)
        y = _bn_train(y, gb_ref[...])
        if residual:
            y = y + x
        o_ref[...] = y
    return kernel


def feed_forward_net_ii(x, params, *, alpha, n_layers):
    """Pad per-layer shapes to lane multiples, stream layer weights, run one pallas_call."""
    layers = params["layers"]
    prelu_a = params["prelu_a"]                        # (1,) f32; 0 <= a <= 1 assumed
    assert len(layers) == n_layers

    n, in_feats = x.shape
    out_feats = layers[-1][0].shape[1]
    in_p = _round_up(in_feats, LANE)
    out_p = _round_up(out_feats, LANE)

    xp = jnp.pad(x, ((0, 0), (0, in_p - in_feats)))

    def pad_w(w, rp, cp):                              # zero-pad then store bf16
        return jnp.pad(w, ((0, rp - w.shape[0]), (0, cp - w.shape[1]))).astype(jnp.bfloat16)

    def pad_gb(g, b, cp):                              # pack gamma/beta -> (2, cp) f32
        gb = jnp.concatenate([g, b], axis=0)
        return jnp.pad(gb, ((0, 0), (0, cp - gb.shape[1])))

    # ---------------- n_layers == 1: single Dense ----------------
    if n_layers == 1:
        w, g, b = layers[0]
        residual = (w.shape[0] == w.shape[1])
        wf = pad_w(w, in_p, out_p)
        gbf = pad_gb(g, b, out_p)
        out_padded = pl.pallas_call(
            _make_kernel_single(residual),
            out_shape=jax.ShapeDtypeStruct((n, out_p), jnp.float32),
            in_specs=[pl.BlockSpec(memory_space=pltpu.MemorySpace.VMEM)] * 3,
            out_specs=pl.BlockSpec(memory_space=pltpu.MemorySpace.VMEM),
            cost_estimate=pl.CostEstimate(
                flops=2 * n * in_p * out_p,
                transcendentals=out_p,
                bytes_accessed=xp.size * 4 + wf.size * 2 + gbf.size * 4 + n * out_p * 4),
        )(xp, wf, gbf)
        return out_padded[:, :out_feats]

    # ---------------- n_layers >= 2: Dense + GCN* + Dense ----------------
    hidden = layers[0][0].shape[1]
    hid_p = _round_up(hidden, LANE)
    n_mid = max(n_layers - 2, 1)

    w0, g0, b0 = layers[0]
    wL, gL, bL = layers[-1]
    residual_first = (w0.shape[0] == w0.shape[1])      # in_feats == hidden
    residual_last = (wL.shape[0] == wL.shape[1])       # hidden == out_feats

    wf = pad_w(w0, in_p, hid_p)                        # (in_p, hid_p)   bf16
    gbf = pad_gb(g0, b0, hid_p)                        # (2, hid_p)      f32
    wl = pad_w(wL, hid_p, out_p)                       # (hid_p, out_p)  bf16
    gbl = pad_gb(gL, bL, out_p)                        # (2, out_p)      f32

    if n_layers > 2:
        wm = jnp.stack([pad_w(w, hid_p, hid_p) for (w, _, _) in layers[1:-1]])
        gbm = jnp.stack([pad_gb(g, b, hid_p) for (_, g, b) in layers[1:-1]])
    else:                                              # no middle layers: dummy block
        wm = jnp.zeros((1, hid_p, hid_p), jnp.bfloat16)
        gbm = jnp.zeros((1, 2, hid_p), jnp.float32)

    kernel = _make_kernel(n_layers, float(alpha), residual_first, residual_last)

    def mid_idx(l):                                    # clamp so l=0 / l=L-1 fetch block 0 / last
        return (jnp.minimum(jnp.maximum(l - 1, 0), n_mid - 1), 0, 0)

    resident_bytes = (xp.size * 4 + wf.size * 2 + gbf.size * 4
                      + 2 * (hid_p * hid_p * 2 + 2 * hid_p * 4)   # double-buffered mid blocks
                      + wl.size * 2 + gbl.size * 4
                      + n * out_p * 4 + 2 * n * hid_p * 4)        # output + x/h0 scratch
    vmem_limit = int(min(64 * 1024 * 1024, max(2 * resident_bytes, 8 * 1024 * 1024)))

    flops = 2 * n * (in_p * hid_p + (n_layers - 2) * hid_p * hid_p + hid_p * out_p)
    bytes_accessed = (xp.size * 4 + wf.size * 2 + gbf.size * 4 + wm.size * 2
                      + gbm.size * 4 + wl.size * 2 + gbl.size * 4 + n * out_p * 4)

    out_padded = pl.pallas_call(
        kernel,
        out_shape=jax.ShapeDtypeStruct((n, out_p), jnp.float32),
        grid=(n_layers,),
        in_specs=[
            pl.BlockSpec(memory_space=pltpu.MemorySpace.SMEM),    # PReLU slope (1,)
            pl.BlockSpec(memory_space=pltpu.MemorySpace.VMEM),    # x padded    (N, in_p)
            pl.BlockSpec(memory_space=pltpu.MemorySpace.VMEM),    # W first     (in_p, hid_p)
            pl.BlockSpec(memory_space=pltpu.MemorySpace.VMEM),    # gamma/beta first
            pl.BlockSpec((1, hid_p, hid_p), mid_idx),             # W mid block (streamed)
            pl.BlockSpec((1, 2, hid_p), mid_idx),                 # gamma/beta mid block
            pl.BlockSpec(memory_space=pltpu.MemorySpace.VMEM),    # W last      (hid_p, out_p)
            pl.BlockSpec(memory_space=pltpu.MemorySpace.VMEM),    # gamma/beta last
        ],
        out_specs=pl.BlockSpec((n, out_p), lambda l: (0, 0)),     # resident; written at l==L-1
        scratch_shapes=[pltpu.VMEM((n, hid_p), jnp.float32),      # running x
                        pltpu.VMEM((n, hid_p), jnp.float32)],     # h0 anchor
        compiler_params=pltpu.CompilerParams(
            dimension_semantics=("arbitrary",),
            vmem_limit_bytes=vmem_limit),
        cost_estimate=pl.CostEstimate(flops=int(flops),
                                      transcendentals=int(n_layers * hid_p),
                                      bytes_accessed=int(bytes_accessed)),
    )(prelu_a, xp, wf, gbf, wm, gbm, wl, gbl)

    # TODO(synk): add a "parallel" row-tile axis (with cross-tile BN stat accumulation) to
    # engage v7x's second TensorCore and feed >=256-row tiles to the v6e/v7x MXU.
    return out_padded[:, :out_feats]


def init_params(key, in_feats, hidden, out_feats, n_layers):
    """Deterministic parameter init matching the torch reset_parameters() shapes."""
    if n_layers == 1:
        dims = [(in_feats, out_feats)]
    else:
        dims = ([(in_feats, hidden)]
                + [(hidden, hidden)] * (n_layers - 2)
                + [(hidden, out_feats)])
    keys = jax.random.split(key, len(dims))
    layers = []
    for k, (din, dout) in zip(keys, dims):
        stdv = 1.0 / math.sqrt(dout)   # both Dense and GraphConvolution use 1/sqrt(out)
        w = jax.random.uniform(k, (din, dout), jnp.float32, -stdv, stdv)
        gamma = jnp.ones((1, dout), jnp.float32)   # fresh BatchNorm1d affine
        beta = jnp.zeros((1, dout), jnp.float32)
        layers.append((w, gamma, beta))
    prelu_a = jnp.full((1,), 0.25, jnp.float32)    # nn.PReLU() default init
    return {"layers": layers, "prelu_a": prelu_a}


def reference(x, params, *, alpha, n_layers, matmul_dtype=None):
    """Pure-JAX reference replicating the torch forward.  matmul_dtype=bfloat16 mirrors
    the kernel's bf16-operand / f32-accumulate matmul path for a tight check."""
    def mm(a, w):
        if matmul_dtype is not None:
            a = a.astype(matmul_dtype)
            w = w.astype(matmul_dtype)
        return jnp.dot(a, w, preferred_element_type=jnp.float32)

    def bn(y, g, b):
        mean = y.mean(0, keepdims=True)
        var = ((y - mean) ** 2).mean(0, keepdims=True)
        return (y - mean) / jnp.sqrt(var + EPS) * g + b

    def prelu(v, a):
        return jnp.where(v > 0, v, a * v)

    layers = params["layers"]
    a = params["prelu_a"]
    w, g, b = layers[0]
    y = bn(mm(x, w), g, b)
    if w.shape[0] == w.shape[1]:
        y = y + x
    x = y
    if n_layers == 1:
        return x
    h0 = x
    for lid in range(1, n_layers - 1):
        w, g, b = layers[lid]
        xa = prelu(x, a)
        support = (1.0 - alpha) * xa + alpha * h0
        x = bn(mm(support, w), g, b) + xa
    w, g, b = layers[-1]
    xa = prelu(x, a)
    y = bn(mm(xa, w), g, b)
    if w.shape[0] == w.shape[1]:
        y = y + xa
    return y


if __name__ == "__main__":
    N, in_feats, hidden, out_feats = 8, 16, 32, 8
    n_layers, alpha = 3, 0.5          # dropout p = 0.0 -> identity

    key = jax.random.PRNGKey(0)
    k_x, k_p = jax.random.split(key)
    x = jax.random.normal(k_x, (N, in_feats), jnp.float32)
    params = init_params(k_p, in_feats, hidden, out_feats, n_layers)

    out = feed_forward_net_ii(x, params, alpha=alpha, n_layers=n_layers)
    out = jax.block_until_ready(out)
    assert out.shape == (N, out_feats), out.shape

    # Tight check vs. a reference using the same bf16-operand / f32-accumulate matmuls.
    ref_bf16 = reference(x, params, alpha=alpha, n_layers=n_layers,
                         matmul_dtype=jnp.bfloat16)
    assert jnp.allclose(out, ref_bf16, rtol=2e-3, atol=2e-3), (out, ref_bf16)

    # Looser check vs. the full-f32 torch-semantics reference (bf16 matmul operands).
    ref_f32 = reference(x, params, alpha=alpha, n_layers=n_layers)
    assert jnp.allclose(out, ref_f32, rtol=5e-2, atol=5e-2), (out, ref_f32)

    print("KERNEL_OK")
</pallas_src>

<mosaic_0001>
module attributes {stable_mosaic.version = 11 : i64} {
  func.func @kernel(%arg0: i32, %arg1: memref<1xf32, #tpu.memory_space<smem>>, %arg2: memref<8x128xf32, #tpu.memory_space<vmem>>, %arg3: memref<128x128xbf16, #tpu.memory_space<vmem>>, %arg4: memref<2x128xf32, #tpu.memory_space<vmem>>, %arg5: memref<1x128x128xbf16, #tpu.memory_space<vmem>>, %arg6: memref<1x2x128xf32, #tpu.memory_space<vmem>>, %arg7: memref<128x128xbf16, #tpu.memory_space<vmem>>, %arg8: memref<2x128xf32, #tpu.memory_space<vmem>>, %arg9: memref<8x128xf32, #tpu.memory_space<vmem>>, %arg10: memref<8x128xf32, #tpu.memory_space<vmem>>, %arg11: memref<8x128xf32, #tpu.memory_space<vmem>>) attributes {dimension_semantics = [#tpu.dimension_semantics<arbitrary>], iteration_bounds = array<i64: 3>, scalar_prefetch = 0 : i64, scratch_operands = 2 : i64, tpu.core_type = #tpu.core_type<tc>, window_params = [{transform_indices = @transform_0, window_bounds = array<i64: 1>}, {pipeline_mode = #tpu.pipeline_mode<synchronous>, transform_indices = @transform_1, window_bounds = array<i64: 8, 128>}, {pipeline_mode = #tpu.pipeline_mode<synchronous>, transform_indices = @transform_2, window_bounds = array<i64: 128, 128>}, {pipeline_mode = #tpu.pipeline_mode<synchronous>, transform_indices = @transform_3, window_bounds = array<i64: 2, 128>}, {transform_indices = @transform_4, window_bounds = array<i64: 1, 128, 128>}, {transform_indices = @transform_5, window_bounds = array<i64: 1, 2, 128>}, {pipeline_mode = #tpu.pipeline_mode<synchronous>, transform_indices = @transform_6, window_bounds = array<i64: 128, 128>}, {pipeline_mode = #tpu.pipeline_mode<synchronous>, transform_indices = @transform_7, window_bounds = array<i64: 2, 128>}, {pipeline_mode = #tpu.pipeline_mode<synchronous>, transform_indices = @transform_8, window_bounds = array<i64: 8, 128>}]} {
    %c0 = arith.constant 0 : index
    %0 = memref.load %arg1[%c0] : memref<1xf32, #tpu.memory_space<smem>>
    %c0_i32 = arith.constant 0 : i32
    %1 = arith.cmpi eq, %arg0, %c0_i32 : i32
    %2 = arith.extui %1 : i1 to i32
    %c0_i32_0 = arith.constant 0 : i32
    %3 = arith.cmpi ne, %2, %c0_i32_0 : i32
    scf.if %3 {
      %c0_5 = arith.constant 0 : index
      %c0_6 = arith.constant 0 : index
      %12 = vector.load %arg2[%c0_5, %c0_6] : memref<8x128xf32, #tpu.memory_space<vmem>>, vector<8x128xf32>
      %13 = arith.truncf %12 : vector<8x128xf32> to vector<8x128xbf16>
      %c0_7 = arith.constant 0 : index
      %c0_8 = arith.constant 0 : index
      %14 = vector.load %arg3[%c0_7, %c0_8] : memref<128x128xbf16, #tpu.memory_space<vmem>>, vector<128x128xbf16>
      %cst = arith.constant dense<0.000000e+00> : vector<8x128xf32>
      %15 = tpu.matmul %13, %14, %cst {dimension_numbers = #tpu.dot_dimension_numbers<[1], [0], [0], [1], [0, 0, 1, 1], [], []>} : vector<8x128xbf16>, vector<128x128xbf16>, vector<8x128xf32> -> vector<8x128xf32>
      %c0_9 = arith.constant 0 : index
      %c0_10 = arith.constant 0 : index
      %16 = vector.load %arg4[%c0_9, %c0_10] : memref<2x128xf32, #tpu.memory_space<vmem>>, vector<2x128xf32>
      %cst_11 = arith.constant dense<0.000000e+00> : vector<128xf32>
      %17 = vector.multi_reduction <add>, %15, %cst_11 [0] : vector<8x128xf32> to vector<128xf32>
      %18 = vector.shape_cast %17 : vector<128xf32> to vector<1x128xf32>
      %19 = arith.mulf %15, %15 : vector<8x128xf32>
      %cst_12 = arith.constant dense<0.000000e+00> : vector<128xf32>
      %20 = vector.multi_reduction <add>, %19, %cst_12 [0] : vector<8x128xf32> to vector<128xf32>
      %21 = vector.shape_cast %20 : vector<128xf32> to vector<1x128xf32>
      %cst_13 = arith.constant 1.250000e-01 : f32
      %22 = vector.broadcast %cst_13 : f32 to vector<1x128xf32>
      %23 = arith.mulf %18, %22 : vector<1x128xf32>
      %cst_14 = arith.constant 1.250000e-01 : f32
      %24 = vector.broadcast %cst_14 : f32 to vector<1x128xf32>
      %25 = arith.mulf %21, %24 : vector<1x128xf32>
      %26 = arith.mulf %23, %23 : vector<1x128xf32>
      %27 = arith.subf %25, %26 : vector<1x128xf32>
      %cst_15 = arith.constant 0.000000e+00 : f32
      %28 = vector.broadcast %cst_15 : f32 to vector<1x128xf32>
      %29 = arith.maximumf %27, %28 : vector<1x128xf32>
      %30 = vector.extract_strided_slice %16 {offsets = [0, 0], sizes = [1, 128], strides = [1, 1]} : vector<2x128xf32> to vector<1x128xf32>
      %31 = vector.extract_strided_slice %16 {offsets = [1, 0], sizes = [1, 128], strides = [1, 1]} : vector<2x128xf32> to vector<1x128xf32>
      %cst_16 = arith.constant 9.99999974E-6 : f32
      %32 = vector.broadcast %cst_16 : f32 to vector<1x128xf32>
      %33 = arith.addf %29, %32 : vector<1x128xf32>
      %34 = math.rsqrt %33 : vector<1x128xf32>
      %35 = arith.mulf %30, %34 : vector<1x128xf32>
      %36 = arith.mulf %23, %35 : vector<1x128xf32>
      %37 = arith.subf %31, %36 : vector<1x128xf32>
      %38 = vector.broadcast %35 : vector<1x128xf32> to vector<8x128xf32>
      %39 = arith.mulf %15, %38 : vector<8x128xf32>
      %40 = vector.broadcast %37 : vector<1x128xf32> to vector<8x128xf32>
      %41 = arith.addf %39, %40 : vector<8x128xf32>
      %c0_17 = arith.constant 0 : index
      %c0_18 = arith.constant 0 : index
      %42 = vector.load %arg10[%c0_17, %c0_18] : memref<8x128xf32, #tpu.memory_space<vmem>>, vector<8x128xf32>
      tpu.vector_store %arg10[%c0_17, %c0_18], %41 {strides = array<i32>} : memref<8x128xf32, #tpu.memory_space<vmem>>, vector<8x128xf32>,
      %c0_19 = arith.constant 0 : index
      %c0_20 = arith.constant 0 : index
      %43 = vector.load %arg11[%c0_19, %c0_20] : memref<8x128xf32, #tpu.memory_space<vmem>>, vector<8x128xf32>
      tpu.vector_store %arg11[%c0_19, %c0_20], %41 {strides = array<i32>} : memref<8x128xf32, #tpu.memory_space<vmem>>, vector<8x128xf32>,
    } else {
    }
    %c0_i32_1 = arith.constant 0 : i32
    %4 = arith.cmpi sgt, %arg0, %c0_i32_1 : i32
    %c2_i32 = arith.constant 2 : i32
    %5 = arith.cmpi slt, %arg0, %c2_i32 : i32
    %6 = arith.andi %4, %5 : i1
    %7 = arith.extui %6 : i1 to i32
    %c0_i32_2 = arith.constant 0 : i32
    %8 = arith.cmpi ne, %7, %c0_i32_2 : i32
    scf.if %8 {
      %c0_5 = arith.constant 0 : index
      %c0_6 = arith.constant 0 : index
      %12 = vector.load %arg10[%c0_5, %c0_6] : memref<8x128xf32, #tpu.memory_space<vmem>>, vector<8x128xf32>
      %13 = vector.broadcast %0 : f32 to vector<8x128xf32>
      %14 = arith.mulf %13, %12 : vector<8x128xf32>
      %15 = arith.maximumf %12, %14 : vector<8x128xf32>
      %cst = arith.constant 5.000000e-01 : f32
      %16 = vector.broadcast %cst : f32 to vector<8x128xf32>
      %17 = arith.mulf %16, %15 : vector<8x128xf32>
      %c0_7 = arith.constant 0 : index
      %c0_8 = arith.constant 0 : index
      %18 = vector.load %arg11[%c0_7, %c0_8] : memref<8x128xf32, #tpu.memory_space<vmem>>, vector<8x128xf32>
      %cst_9 = arith.constant 5.000000e-01 : f32
      %19 = vector.broadcast %cst_9 : f32 to vector<8x128xf32>
      %20 = arith.mulf %19, %18 : vector<8x128xf32>
      %21 = arith.addf %17, %20 : vector<8x128xf32>
      %22 = arith.truncf %21 : vector<8x128xf32> to vector<8x128xbf16>
      %c0_10 = arith.constant 0 : index
      %c0_11 = arith.constant 0 : index
      %c0_12 = arith.constant 0 : index
      %23 = vector.load %arg5[%c0_10, %c0_11, %c0_12] : memref<1x128x128xbf16, #tpu.memory_space<vmem>>, vector<1x128x128xbf16>
      %24 = vector.shape_cast %23 : vector<1x128x128xbf16> to vector<128x128xbf16>
      %cst_13 = arith.constant dense<0.000000e+00> : vector<8x128xf32>
      %25 = tpu.matmul %22, %24, %cst_13 {dimension_numbers = #tpu.dot_dimension_numbers<[1], [0], [0], [1], [0, 0, 1, 1], [], []>} : vector<8x128xbf16>, vector<128x128xbf16>, vector<8x128xf32> -> vector<8x128xf32>
      %c0_14 = arith.constant 0 : index
      %c0_15 = arith.constant 0 : index
      %c0_16 = arith.constant 0 : index
      %26 = vector.load %arg6[%c0_14, %c0_15, %c0_16] : memref<1x2x128xf32, #tpu.memory_space<vmem>>, vector<1x2x128xf32>
      %27 = vector.shape_cast %26 : vector<1x2x128xf32> to vector<2x128xf32>
      %cst_17 = arith.constant dense<0.000000e+00> : vector<128xf32>
      %28 = vector.multi_reduction <add>, %25, %cst_17 [0] : vector<8x128xf32> to vector<128xf32>
      %29 = vector.shape_cast %28 : vector<128xf32> to vector<1x128xf32>
      %30 = arith.mulf %25, %25 : vector<8x128xf32>
      %cst_18 = arith.constant dense<0.000000e+00> : vector<128xf32>
      %31 = vector.multi_reduction <add>, %30, %cst_18 [0] : vector<8x128xf32> to vector<128xf32>
      %32 = vector.shape_cast %31 : vector<128xf32> to vector<1x128xf32>
      %cst_19 = arith.constant 1.250000e-01 : f32
      %33 = vector.broadcast %cst_19 : f32 to vector<1x128xf32>
      %34 = arith.mulf %29, %33 : vector<1x128xf32>
      %cst_20 = arith.constant 1.250000e-01 : f32
      %35 = vector.broadcast %cst_20 : f32 to vector<1x128xf32>
      %36 = arith.mulf %32, %35 : vector<1x128xf32>
      %37 = arith.mulf %34, %34 : vector<1x128xf32>
      %38 = arith.subf %36, %37 : vector<1x128xf32>
      %cst_21 = arith.constant 0.000000e+00 : f32
      %39 = vector.broadcast %cst_21 : f32 to vector<1x128xf32>
      %40 = arith.maximumf %38, %39 : vector<1x128xf32>
      %41 = vector.extract_strided_slice %27 {offsets = [0, 0], sizes = [1, 128], strides = [1, 1]} : vector<2x128xf32> to vector<1x128xf32>
      %42 = vector.extract_strided_slice %27 {offsets = [1, 0], sizes = [1, 128], strides = [1, 1]} : vector<2x128xf32> to vector<1x128xf32>
      %cst_22 = arith.constant 9.99999974E-6 : f32
      %43 = vector.broadcast %cst_22 : f32 to vector<1x128xf32>
      %44 = arith.addf %40, %43 : vector<1x128xf32>
      %45 = math.rsqrt %44 : vector<1x128xf32>
      %46 = arith.mulf %41, %45 : vector<1x128xf32>
      %47 = arith.mulf %34, %46 : vector<1x128xf32>
      %48 = arith.subf %42, %47 : vector<1x128xf32>
      %49 = vector.broadcast %46 : vector<1x128xf32> to vector<8x128xf32>
      %50 = arith.mulf %25, %49 : vector<8x128xf32>
      %51 = vector.broadcast %48 : vector<1x128xf32> to vector<8x128xf32>
      %52 = arith.addf %50, %51 : vector<8x128xf32>
      %53 = arith.addf %52, %15 : vector<8x128xf32>
      %c0_23 = arith.constant 0 : index
      %c0_24 = arith.constant 0 : index
      %54 = vector.load %arg10[%c0_23, %c0_24] : memref<8x128xf32, #tpu.memory_space<vmem>>, vector<8x128xf32>
      tpu.vector_store %arg10[%c0_23, %c0_24], %53 {strides = array<i32>} : memref<8x128xf32, #tpu.memory_space<vmem>>, vector<8x128xf32>,
    } else {
    }
    %c2_i32_3 = arith.constant 2 : i32
    %9 = arith.cmpi eq, %arg0, %c2_i32_3 : i32
    %10 = arith.extui %9 : i1 to i32
    %c0_i32_4 = arith.constant 0 : i32
    %11 = arith.cmpi ne, %10, %c0_i32_4 : i32
    scf.if %11 {
      %c0_5 = arith.constant 0 : index
      %c0_6 = arith.constant 0 : index
      %12 = vector.load %arg10[%c0_5, %c0_6] : memref<8x128xf32, #tpu.memory_space<vmem>>, vector<8x128xf32>
      %13 = vector.broadcast %0 : f32 to vector<8x128xf32>
      %14 = arith.mulf %13, %12 : vector<8x128xf32>
      %15 = arith.maximumf %12, %14 : vector<8x128xf32>
      %16 = arith.truncf %15 : vector<8x128xf32> to vector<8x128xbf16>
      %c0_7 = arith.constant 0 : index
      %c0_8 = arith.constant 0 : index
      %17 = vector.load %arg7[%c0_7, %c0_8] : memref<128x128xbf16, #tpu.memory_space<vmem>>, vector<128x128xbf16>
      %cst = arith.constant dense<0.000000e+00> : vector<8x128xf32>
      %18 = tpu.matmul %16, %17, %cst {dimension_numbers = #tpu.dot_dimension_numbers<[1], [0], [0], [1], [0, 0, 1, 1], [], []>} : vector<8x128xbf16>, vector<128x128xbf16>, vector<8x128xf32> -> vector<8x128xf32>
      %c0_9 = arith.constant 0 : index
      %c0_10 = arith.constant 0 : index
      %19 = vector.load %arg8[%c0_9, %c0_10] : memref<2x128xf32, #tpu.memory_space<vmem>>, vector<2x128xf32>
      %cst_11 = arith.constant dense<0.000000e+00> : vector<128xf32>
      %20 = vector.multi_reduction <add>, %18, %cst_11 [0] : vector<8x128xf32> to vector<128xf32>
      %21 = vector.shape_cast %20 : vector<128xf32> to vector<1x128xf32>
      %22 = arith.mulf %18, %18 : vector<8x128xf32>
      %cst_12 = arith.constant dense<0.000000e+00> : vector<128xf32>
      %23 = vector.multi_reduction <add>, %22, %cst_12 [0] : vector<8x128xf32> to vector<128xf32>
      %24 = vector.shape_cast %23 : vector<128xf32> to vector<1x128xf32>
      %cst_13 = arith.constant 1.250000e-01 : f32
      %25 = vector.broadcast %cst_13 : f32 to vector<1x128xf32>
      %26 = arith.mulf %21, %25 : vector<1x128xf32>
      %cst_14 = arith.constant 1.250000e-01 : f32
      %27 = vector.broadcast %cst_14 : f32 to vector<1x128xf32>
      %28 = arith.mulf %24, %27 : vector<1x128xf32>
      %29 = arith.mulf %26, %26 : vector<1x128xf32>
      %30 = arith.subf %28, %29 : vector<1x128xf32>
      %cst_15 = arith.constant 0.000000e+00 : f32
      %31 = vector.broadcast %cst_15 : f32 to vector<1x128xf32>
      %32 = arith.maximumf %30, %31 : vector<1x128xf32>
      %33 = vector.extract_strided_slice %19 {offsets = [0, 0], sizes = [1, 128], strides = [1, 1]} : vector<2x128xf32> to vector<1x128xf32>
      %34 = vector.extract_strided_slice %19 {offsets = [1, 0], sizes = [1, 128], strides = [1, 1]} : vector<2x128xf32> to vector<1x128xf32>
      %cst_16 = arith.constant 9.99999974E-6 : f32
      %35 = vector.broadcast %cst_16 : f32 to vector<1x128xf32>
      %36 = arith.addf %32, %35 : vector<1x128xf32>
      %37 = math.rsqrt %36 : vector<1x128xf32>
      %38 = arith.mulf %33, %37 : vector<1x128xf32>
      %39 = arith.mulf %26, %38 : vector<1x128xf32>
      %40 = arith.subf %34, %39 : vector<1x128xf32>
      %41 = vector.broadcast %38 : vector<1x128xf32> to vector<8x128xf32>
      %42 = arith.mulf %18, %41 : vector<8x128xf32>
      %43 = vector.broadcast %40 : vector<1x128xf32> to vector<8x128xf32>
      %44 = arith.addf %42, %43 : vector<8x128xf32>
      %c0_17 = arith.constant 0 : index
      %c0_18 = arith.constant 0 : index
      %45 = vector.load %arg9[%c0_17, %c0_18] : memref<8x128xf32, #tpu.memory_space<vmem>>, vector<8x128xf32>
      tpu.vector_store %arg9[%c0_17, %c0_18], %44 {strides = array<i32>} : memref<8x128xf32, #tpu.memory_space<vmem>>, vector<8x128xf32>,
    } else {
    }
    return
  }
  func.func @transform_0(%arg0: i32) -> i32 {
    %c0_i32 = arith.constant 0 : i32
    %c0_i32_0 = arith.constant 0 : i32
    return %c0_i32 : i32
  }
  func.func @transform_1(%arg0: i32) -> (i32, i32) {
    %c0_i32 = arith.constant 0 : i32
    %c0_i32_0 = arith.constant 0 : i32
    %c0_i32_1 = arith.constant 0 : i32
    return %c0_i32, %c0_i32_0 : i32, i32
  }
  func.func @transform_2(%arg0: i32) -> (i32, i32) {
    %c0_i32 = arith.constant 0 : i32
    %c0_i32_0 = arith.constant 0 : i32
    %c0_i32_1 = arith.constant 0 : i32
    return %c0_i32, %c0_i32_0 : i32, i32
  }
  func.func @transform_3(%arg0: i32) -> (i32, i32) {
    %c0_i32 = arith.constant 0 : i32
    %c0_i32_0 = arith.constant 0 : i32
    %c0_i32_1 = arith.constant 0 : i32
    return %c0_i32, %c0_i32_0 : i32, i32
  }
  func.func @transform_4(%arg0: i32) -> (i32, i32, i32) {
    %c1_i32 = arith.constant 1 : i32
    %0 = arith.subi %arg0, %c1_i32 : i32
    %c0_i32 = arith.constant 0 : i32
    %1 = arith.maxsi %0, %c0_i32 : i32
    %c0_i32_0 = arith.constant 0 : i32
    %2 = arith.minsi %1, %c0_i32_0 : i32
    %c0_i32_1 = arith.constant 0 : i32
    %c0_i32_2 = arith.constant 0 : i32
    %c0_i32_3 = arith.constant 0 : i32
    return %2, %c0_i32_1, %c0_i32_2 : i32, i32, i32
  }
  func.func @transform_5(%arg0: i32) -> (i32, i32, i32) {
    %c1_i32 = arith.constant 1 : i32
    %0 = arith.subi %arg0, %c1_i32 : i32
    %c0_i32 = arith.constant 0 : i32
    %1 = arith.maxsi %0, %c0_i32 : i32
    %c0_i32_0 = arith.constant 0 : i32
    %2 = arith.minsi %1, %c0_i32_0 : i32
    %c0_i32_1 = arith.constant 0 : i32
    %c0_i32_2 = arith.constant 0 : i32
    %c0_i32_3 = arith.constant 0 : i32
    return %2, %c0_i32_1, %c0_i32_2 : i32, i32, i32
  }
  func.func @transform_6(%arg0: i32) -> (i32, i32) {
    %c0_i32 = arith.constant 0 : i32
    %c0_i32_0 = arith.constant 0 : i32
    %c0_i32_1 = arith.constant 0 : i32
    return %c0_i32, %c0_i32_0 : i32, i32
  }
  func.func @transform_7(%arg0: i32) -> (i32, i32) {
    %c0_i32 = arith.constant 0 : i32
    %c0_i32_0 = arith.constant 0 : i32
    %c0_i32_1 = arith.constant 0 : i32
    return %c0_i32, %c0_i32_0 : i32, i32
  }
  func.func @transform_8(%arg0: i32) -> (i32, i32) {
    %c0_i32 = arith.constant 0 : i32
    %c0_i32_0 = arith.constant 0 : i32
    %c0_i32_1 = arith.constant 0 : i32
    return %c0_i32, %c0_i32_0 : i32, i32
  }
}

</mosaic_0001>

<llo_original>
// kernel: tpu_custom_call.1
$region0: #{tpu_custom_call.1}
  #allocation0 [shape = 'u32[]', space=smem, size = 0x4, offset = 0x4, fixed_abs, tag = 'smem constant byte address 0x4 - core index']
  #allocation1 [shape = 'u32[144,128]{1,0:T(1,128)}', space=vmem, size = 0x12000, scoped, tag = 'internal scratch']
  #allocation2 [shape = 'f32[8,128]{1,0:T(8,128)}', space=vmem, size = 0x1000, scoped, tag = 'scratch operand']
  #allocation3 [shape = 'f32[8,128]{1,0:T(8,128)}', space=vmem, size = 0x1000, scoped, tag = 'scratch operand']
  #allocation4 [shape = 'f32[1]{0:T(128)S(6)}', space=smem, size = 0x200, scoped, tag = 'scoped memory for tpu_custom_call.1']
  %s0 = inlined_call_operand.<no memory space> [shape: f32[1], index: 0, kind: input, shape index: {}]
  %s1 = inlined_call_operand.hbm [shape: f32[8,128], index: 1, kind: input, shape index: {}]
  %s2 = inlined_call_operand.hbm [shape: bf16[128,128], index: 2, kind: input, shape index: {}]
  %s3 = inlined_call_operand.vmem [shape: f32[2,128], index: 3, kind: input, shape index: {}]
  %s4 = inlined_call_operand.hbm [shape: bf16[1,128,128], index: 4, kind: input, shape index: {}]
  %s5 = inlined_call_operand.vmem [shape: f32[1,2,128], index: 5, kind: input, shape index: {}]
  %s6 = inlined_call_operand.hbm [shape: bf16[128,128], index: 6, kind: input, shape index: {}]
  %s7 = inlined_call_operand.vmem [shape: f32[2,128], index: 7, kind: input, shape index: {}]
  %s8 = inlined_call_operand.hbm [shape: f32[8,128], index: 8, kind: output, shape index: {}]
  %s9 = sld [smem:[#allocation0]]
  $region93: #{tpu_custom_call.1} parent=0
    _
  %s11 = ssub.s32 1, %s9
  %s12 = scalar_select 0, %s11, %s9
  %13 = sst [smem:[#allocation4]] %s0
  $region1: #{tpu_custom_call.1} parent=0
    #allocation5 [shape = 'u8[4096]{0}', space=vmem, size = 0x1000, scoped, tag = 'input window, operand 1, single buffered']
    #allocation6 [shape = 's32[2]{0}', space=sflag, size = 0x8, scoped, tag = 'scoped memory for tpu_custom_call.1']
    #allocation7 [shape = 's32[2]{0}', space=sflag, size = 0x8, scoped, tag = 'scoped memory for tpu_custom_call.1']
    #allocation8 [shape = 'u8[32768]{0}', space=vmem, size = 0x8000, scoped, tag = 'input window, operand 2, single buffered']
    #allocation9 [shape = 's32[1]{0}', space=sflag, size = 0x4, scoped, tag = 'scoped memory for tpu_custom_call.1']
    #allocation10 [shape = 'u8[65536]{0}', space=vmem, size = 0x10000, scoped, tag = 'input window, operand 4']
    #allocation11 [shape = 'u8[32768]{0}', space=vmem, size = 0x8000, scoped, tag = 'input window, operand 6, single buffered']
    #allocation12 [shape = 'u8[4096]{0}', space=vmem, size = 0x1000, scoped, tag = 'output window, operand 0, single buffered']
    %14 = vsyncpa [#allocation6], 0
    %15 = vsyncpa [#allocation9], 0
    %16 = vsyncpa [#allocation7], 0
    loop: start=0, step=1, limit=5
    $region2: #{tpu_custom_call.1} parent=1 // loop_pre_header
      _
    $region3: #{tpu_custom_call.1} parent=1 // loop_header
      %s18 = sphi 0, %s22
      %p19 = scmp.ge.s32.totalorder %s18, 5
      %s26 = sphi 0, %s26
      %s28 = sphi 0, %s26
      %s29 = sphi 0, %s28
      %s43 = sphi 0, %s29
      %s47 = sphi 0, %s47
      %s49 = sphi 0, %s47
      %s50 = sphi 0, %s49
      %s64 = sphi 0, %s50
      %s68 = sphi 0, %s68
      %s70 = sphi 0, %s68
      %s71 = sphi 0, %s70
      %s85 = sphi 0, %s71
      %s89 = sphi 0, %s89
      %s91 = sphi 0, %s89
      %s92 = sphi 0, %s91
      %s106 = sphi 0, %s92
      %s122 = sphi 0, %s124
      %s125 = sphi 0, %s122
      %s126 = sphi 0, %s125
      %s142 = sphi 0, %s126
      %s158 = sphi 0, %s160
      %s161 = sphi 0, %s158
      %s162 = sphi 0, %s161
      %s178 = sphi 0, %s162
      %s182 = sphi 0, %s182
      %s184 = sphi 0, %s182
      %s185 = sphi 0, %s184
      %s199 = sphi 0, %s185
      %s203 = sphi 0, %s203
      %s205 = sphi 0, %s203
      %s206 = sphi 0, %s205
      %s220 = sphi 0, %s206
      %s224 = sphi 0, %s224
      %s226 = sphi 0, %s224
      %s227 = sphi 0, %s226
      %s241 = sphi 0, %s227
    $region4: #{tpu_custom_call.1} parent=1 // loop_header_branch
      %21 = sbr.rel (%p19) target = $region8
    $region5: #{tpu_custom_call.1} parent=1 // loop_body
      %s23 = ssub.s32 %s18, 1
      %s24 = ssub.s32 %s18, 2
      %s25 = sadd.s32 %s18, 1
      %s27 = sadd.s32 %s26, 1
      %p30 = scmp.eq.s32.totalorder %s18, 2
      %p31 = scmp.ne.s32.totalorder %s26, %s28
      %p32 = scmp.eq.s32.totalorder %s18, 0
      %p33 = por %p31, %p32
      %p34 = scmp.ne.s32.totalorder %s26, %s28
      %p35 = scmp.eq.s32.totalorder %s23, 2
      %p36 = por %p34, %p35
      %p37 = scmp.ne.s32.totalorder %s28, %s29
      %p38 = scmp.eq.s32.totalorder %s23, 0
      %p39 = por %p37, %p38
      %p40 = scmp.ne.s32.totalorder %s28, %s29
      %p41 = scmp.eq.s32.totalorder %s24, 2
      %p42 = por %p40, %p41
      %p44 = scmp.ne.s32.totalorder %s29, %s43
      %p45 = scmp.eq.s32.totalorder %s24, 0
      %p46 = por %p44, %p45
      %s48 = sadd.s32 %s47, 1
      %p51 = scmp.eq.s32.totalorder %s18, 2
      %p52 = scmp.ne.s32.totalorder %s47, %s49
      %p53 = scmp.eq.s32.totalorder %s18, 0
      %p54 = por %p52, %p53
      %p55 = scmp.ne.s32.totalorder %s47, %s49
      %p56 = scmp.eq.s32.totalorder %s23, 2
      %p57 = por %p55, %p56
      %p58 = scmp.ne.s32.totalorder %s49, %s50
      %p59 = scmp.eq.s32.totalorder %s23, 0
      %p60 = por %p58, %p59
      %p61 = scmp.ne.s32.totalorder %s49, %s50
      %p62 = scmp.eq.s32.totalorder %s24, 2
      %p63 = por %p61, %p62
      %p65 = scmp.ne.s32.totalorder %s50, %s64
      %p66 = scmp.eq.s32.totalorder %s24, 0
      %p67 = por %p65, %p66
      %s69 = sadd.s32 %s68, 1
      %p72 = scmp.eq.s32.totalorder %s18, 2
      %p73 = scmp.ne.s32.totalorder %s68, %s70
      %p74 = scmp.eq.s32.totalorder %s18, 0
      %p75 = por %p73, %p74
      %p76 = scmp.ne.s32.totalorder %s68, %s70
      %p77 = scmp.eq.s32.totalorder %s23, 2
      %p78 = por %p76, %p77
      %p79 = scmp.ne.s32.totalorder %s70, %s71
      %p80 = scmp.eq.s32.totalorder %s23, 0
      %p81 = por %p79, %p80
      %p82 = scmp.ne.s32.totalorder %s70, %s71
      %p83 = scmp.eq.s32.totalorder %s24, 2
      %p84 = por %p82, %p83
      %p86 = scmp.ne.s32.totalorder %s71, %s85
      %p87 = scmp.eq.s32.totalorder %s24, 0
      %p88 = por %p86, %p87
      %s90 = sadd.s32 %s89, 1
      %p93 = scmp.eq.s32.totalorder %s18, 2
      %p94 = scmp.ne.s32.totalorder %s89, %s91
      %p95 = scmp.eq.s32.totalorder %s18, 0
      %p96 = por %p94, %p95
      %p97 = scmp.ne.s32.totalorder %s89, %s91
      %p98 = scmp.eq.s32.totalorder %s23, 2
      %p99 = por %p97, %p98
      %p100 = scmp.ne.s32.totalorder %s91, %s92
      %p101 = scmp.eq.s32.totalorder %s23, 0
      %p102 = por %p100, %p101
      %p103 = scmp.ne.s32.totalorder %s91, %s92
      %p104 = scmp.eq.s32.totalorder %s24, 2
      %p105 = por %p103, %p104
      %p107 = scmp.ne.s32.totalorder %s92, %s106
      %p108 = scmp.eq.s32.totalorder %s24, 0
      %p109 = por %p107, %p108
      %s110 = ssub.s32 %s18, 1
      %p111 = scmp.gt.s32.totalorder %s110, 0
      %s112 = scalar_select %p111, %s110, 0
      %p113 = scmp.lt.s32.totalorder %s112, 0
      %s114 = scalar_select %p113, %s112, 0
      %s115 = ssub.s32 %s25, 1
      %p116 = scmp.gt.s32.totalorder %s115, 0
      %s117 = scalar_select %p116, %s115, 0
      %p118 = scmp.lt.s32.totalorder %s117, 0
      %s119 = scalar_select %p118, %s117, 0
      %s120 = ssub.s32 %s114, %s119
      %p121 = scmp.eq.s32.totalorder %s120, 0
      %s123 = sadd.s32 %s122, 1
      %s124 = scalar_select %p121, %s122, %s123
      %p127 = pneg %p121
      %p128 = scmp.eq.s32.totalorder %s18, 2
      %p129 = por %p127, %p128
      %p130 = scmp.ne.s32.totalorder %s122, %s125
      %p131 = scmp.eq.s32.totalorder %s18, 0
      %p132 = por %p130, %p131
      %p133 = scmp.ne.s32.totalorder %s122, %s125
      %p134 = scmp.eq.s32.totalorder %s23, 2
      %p135 = por %p133, %p134
      %p136 = scmp.ne.s32.totalorder %s125, %s126
      %p137 = scmp.eq.s32.totalorder %s23, 0
      %p138 = por %p136, %p137
      %p139 = scmp.ne.s32.totalorder %s125, %s126
      %p140 = scmp.eq.s32.totalorder %s24, 2
      %p141 = por %p139, %p140
      %p143 = scmp.ne.s32.totalorder %s126, %s142
      %p144 = scmp.eq.s32.totalorder %s24, 0
      %p145 = por %p143, %p144
      %s146 = ssub.s32 %s18, 1
      %p147 = scmp.gt.s32.totalorder %s146, 0
      %s148 = scalar_select %p147, %s146, 0
      %p149 = scmp.lt.s32.totalorder %s148, 0
      %s150 = scalar_select %p149, %s148, 0
      %s151 = ssub.s32 %s25, 1
      %p152 = scmp.gt.s32.totalorder %s151, 0
      %s153 = scalar_select %p152, %s151, 0
      %p154 = scmp.lt.s32.totalorder %s153, 0
      %s155 = scalar_select %p154, %s153, 0
      %s156 = ssub.s32 %s150, %s155
      %p157 = scmp.eq.s32.totalorder %s156, 0
      %s159 = sadd.s32 %s158, 1
      %s160 = scalar_select %p157, %s158, %s159
      %p163 = pneg %p157
      %p164 = scmp.eq.s32.totalorder %s18, 2
      %p165 = por %p163, %p164
      %p166 = scmp.ne.s32.totalorder %s158, %s161
      %p167 = scmp.eq.s32.totalorder %s18, 0
      %p168 = por %p166, %p167
      %p169 = scmp.ne.s32.totalorder %s158, %s161
      %p170 = scmp.eq.s32.totalorder %s23, 2
      %p171 = por %p169, %p170
      %p172 = scmp.ne.s32.totalorder %s161, %s162
      %p173 = scmp.eq.s32.totalorder %s23, 0
      %p174 = por %p172, %p173
      %p175 = scmp.ne.s32.totalorder %s161, %s162
      %p176 = scmp.eq.s32.totalorder %s24, 2
      %p177 = por %p175, %p176
      %p179 = scmp.ne.s32.totalorder %s162, %s178
      %p180 = scmp.eq.s32.totalorder %s24, 0
      %p181 = por %p179, %p180
      %s183 = sadd.s32 %s182, 1
      %p186 = scmp.eq.s32.totalorder %s18, 2
      %p187 = scmp.ne.s32.totalorder %s182, %s184
      %p188 = scmp.eq.s32.totalorder %s18, 0
      %p189 = por %p187, %p188
      %p190 = scmp.ne.s32.totalorder %s182, %s184
      %p191 = scmp.eq.s32.totalorder %s23, 2
      %p192 = por %p190, %p191
      %p193 = scmp.ne.s32.totalorder %s184, %s185
      %p194 = scmp.eq.s32.totalorder %s23, 0
      %p195 = por %p193, %p194
      %p196 = scmp.ne.s32.totalorder %s184, %s185
      %p197 = scmp.eq.s32.totalorder %s24, 2
      %p198 = por %p196, %p197
      %p200 = scmp.ne.s32.totalorder %s185, %s199
      %p201 = scmp.eq.s32.totalorder %s24, 0
      %p202 = por %p200, %p201
      %s204 = sadd.s32 %s203, 1
      %p207 = scmp.eq.s32.totalorder %s18, 2
      %p208 = scmp.ne.s32.totalorder %s203, %s205
      %p209 = scmp.eq.s32.totalorder %s18, 0
      %p210 = por %p208, %p209
      %p211 = scmp.ne.s32.totalorder %s203, %s205
      %p212 = scmp.eq.s32.totalorder %s23, 2
      %p213 = por %p211, %p212
      %p214 = scmp.ne.s32.totalorder %s205, %s206
      %p215 = scmp.eq.s32.totalorder %s23, 0
      %p216 = por %p214, %p215
      %p217 = scmp.ne.s32.totalorder %s205, %s206
      %p218 = scmp.eq.s32.totalorder %s24, 2
      %p219 = por %p217, %p218
      %p221 = scmp.ne.s32.totalorder %s206, %s220
      %p222 = scmp.eq.s32.totalorder %s24, 0
      %p223 = por %p221, %p222
      %s225 = sadd.s32 %s224, 1
      %p228 = scmp.eq.s32.totalorder %s18, 2
      %p229 = scmp.ne.s32.totalorder %s224, %s226
      %p230 = scmp.eq.s32.totalorder %s18, 0
      %p231 = por %p229, %p230
      %p232 = scmp.ne.s32.totalorder %s224, %s226
      %p233 = scmp.eq.s32.totalorder %s23, 2
      %p234 = por %p232, %p233
      %p235 = scmp.ne.s32.totalorder %s226, %s227
      %p236 = scmp.eq.s32.totalorder %s23, 0
      %p237 = por %p235, %p236
      %p238 = scmp.ne.s32.totalorder %s226, %s227
      %p239 = scmp.eq.s32.totalorder %s24, 2
      %p240 = por %p238, %p239
      %p242 = scmp.ne.s32.totalorder %s227, %s241
      %p243 = scmp.eq.s32.totalorder %s24, 0
      %p244 = por %p242, %p243
      %p245 = scmp.le.s32.totalorder 1, %s18
      %p246 = scmp.lt.s32.totalorder %s18, 4
      %p247 = pnand %p245, %p246
      %p248 = pneg %p247
      // Predicated region
      $region9: #{tpu_custom_call.1} parent=5 // pred_check
        _
      $region10: #{tpu_custom_call.1} parent=5 // pred_check_branch
        %250 = sbr.rel (%p247) target = $region12
      $region11: #{tpu_custom_call.1} parent=5 // pred_region
        %s251 = ssub.s32 %s18, 1
        // Predicated region
        $region13: #{tpu_custom_call.1} parent=11 // pred_check
          %p252 = pneg %p39
        $region14: #{tpu_custom_call.1} parent=11 // pred_check_branch
          %254 = sbr.rel (%p252) target = $region16
        $region15: #{tpu_custom_call.1} parent=11 // pred_region
          _
        $region16: #{tpu_custom_call.1} parent=11 // pred_fallthru
          _
        // Predicated region
        $region17: #{tpu_custom_call.1} parent=11 // pred_check
          %p255 = pneg %p60
        $region18: #{tpu_custom_call.1} parent=11 // pred_check_branch
          %257 = sbr.rel (%p255) target = $region20
        $region19: #{tpu_custom_call.1} parent=11 // pred_region
          %s259 = ssub.s32 128, 128
          %260 = vsyncadd [#allocation6], %s259
          %s262 = sshll.u32 [#allocation5], 4
          %s263 = int_to_ptr.vmem [resolvable:$true] %s262
          %265 = dma.hbm_to_vmem [thread:$0]  %s1, 128, %s263, [#allocation6]
        $region20: #{tpu_custom_call.1} parent=11 // pred_fallthru
          _
        // Predicated region
        $region21: #{tpu_custom_call.1} parent=11 // pred_check
          %p266 = pneg %p81
        $region22: #{tpu_custom_call.1} parent=11 // pred_check_branch
          %268 = sbr.rel (%p266) target = $region24
        $region23: #{tpu_custom_call.1} parent=11 // pred_region
          %s270 = ssub.s32 1024, 1024
          %271 = vsyncadd [#allocation9], %s270
          %s272 = sshll.u32 [#allocation8], 4
          %s273 = int_to_ptr.vmem [resolvable:$true] %s272
          %278 = dma.hbm_to_vmem [thread:$0]  %s2, 1024, %s273, [#allocation9], 64, 64, 4
        $region24: #{tpu_custom_call.1} parent=11 // pred_fallthru
          _
        // Predicated region
        $region25: #{tpu_custom_call.1} parent=11 // pred_check
          %p279 = pneg %p102
        $region26: #{tpu_custom_call.1} parent=11 // pred_check_branch
          %281 = sbr.rel (%p279) target = $region28
        $region27: #{tpu_custom_call.1} parent=11 // pred_region
          _
        $region28: #{tpu_custom_call.1} parent=11 // pred_fallthru
          _
        // Predicated region
        $region29: #{tpu_custom_call.1} parent=11 // pred_check
          %p282 = pneg %p195
        $region30: #{tpu_custom_call.1} parent=11 // pred_check_branch
          %284 = sbr.rel (%p282) target = $region32
        $region31: #{tpu_custom_call.1} parent=11 // pred_region
          %s286 = ssub.s32 1024, 1024
          %287 = vsyncadd [#allocation9], %s286
          %s288 = sshll.u32 [#allocation11], 4
          %s289 = int_to_ptr.vmem [resolvable:$true] %s288
          %294 = dma.hbm_to_vmem [thread:$0]  %s6, 1024, %s289, [#allocation9], 64, 64, 4
        $region32: #{tpu_custom_call.1} parent=11 // pred_fallthru
          _
        // Predicated region
        $region33: #{tpu_custom_call.1} parent=11 // pred_check
          %p295 = pneg %p216
        $region34: #{tpu_custom_call.1} parent=11 // pred_check_branch
          %297 = sbr.rel (%p295) target = $region36
        $region35: #{tpu_custom_call.1} parent=11 // pred_region
          _
        $region36: #{tpu_custom_call.1} parent=11 // pred_fallthru
          _
      $region12: #{tpu_custom_call.1} parent=5 // pred_fallthru
        _
      %p298 = scmp.lt.s32.totalorder %s18, 3
      // Predicated region
      $region37: #{tpu_custom_call.1} parent=5 // pred_check
        %p299 = pneg %p298
      $region38: #{tpu_custom_call.1} parent=5 // pred_check_branch
        %301 = sbr.rel (%p299) target = $region40
      $region39: #{tpu_custom_call.1} parent=5 // pred_region
        // Predicated region
        $region41: #{tpu_custom_call.1} parent=39 // pred_check
          %p302 = pneg %p132
        $region42: #{tpu_custom_call.1} parent=39 // pred_check_branch
          %304 = sbr.rel (%p302) target = $region44
        $region43: #{tpu_custom_call.1} parent=39 // pred_region
          %s305 = sand.u32 %s18, 1
          %s306 = scalar_lea.sflag [#allocation6], %s305
          %s307 = sand.u32 %s122, 1
          %s308 = smul.addr %s307, 64
          %s309 = scalar_lea.vmem [#allocation10], %s308
          %s310 = ssub.s32 %s18, 1
          %p311 = scmp.gt.s32.totalorder %s310, 0
          %s312 = scalar_select %p311, %s310, 0
          %p313 = scmp.lt.s32.totalorder %s312, 0
          %s314 = scalar_select %p313, %s312, 0
          %s316 = ssub.s32 1024, 1024
          %317 = vsyncadd %s306, %s316
          %s318 = smul.addr %s314, 16
          %s319 = smul.addr %s318, 64
          %s320 = scalar_lea.hbm %s4, %s319
          %s321 = sshll.u32 %s309, 4
          %s322 = int_to_ptr.vmem [resolvable:$true] %s321
          %327 = dma.hbm_to_vmem [thread:$0]  %s320, 1024, %s322, %s306, 64, 64, 4
        $region44: #{tpu_custom_call.1} parent=39 // pred_fallthru
          _
        // Predicated region
        $region45: #{tpu_custom_call.1} parent=39 // pred_check
          %p328 = pneg %p168
        $region46: #{tpu_custom_call.1} parent=39 // pred_check_branch
          %330 = sbr.rel (%p328) target = $region48
        $region47: #{tpu_custom_call.1} parent=39 // pred_region
          %s331 = ssub.s32 %s18, 1
          %p332 = scmp.gt.s32.totalorder %s331, 0
          %s333 = scalar_select %p332, %s331, 0
          %p334 = scmp.lt.s32.totalorder %s333, 0
          %s335 = scalar_select %p334, %s333, 0
          %p336 = scmp.lt.s32.totalorder %s335, 0
          %s337 = scalar_select %p336, %s335, 0
          %s338 = smul.addr %s337, 2
          %s339 = scalar_lea.vmem %s5, %s338
          %s340 = ssub.s32 %s18, 1
          %p341 = scmp.gt.s32.totalorder %s340, 0
          %s342 = scalar_select %p341, %s340, 0
          %p343 = scmp.lt.s32.totalorder %s342, 0
          %s344 = scalar_select %p343, %s342, 0
        $region48: #{tpu_custom_call.1} parent=39 // pred_fallthru
          _
      $region40: #{tpu_custom_call.1} parent=5 // pred_fallthru
        _
      %p345 = scmp.le.s32.totalorder 1, %s18
      %p346 = scmp.lt.s32.totalorder %s18, 4
      %p347 = pnand %p345, %p346
      %p348 = pneg %p347
      // Predicated region
      $region49: #{tpu_custom_call.1} parent=5 // pred_check
        _
      $region50: #{tpu_custom_call.1} parent=5 // pred_check_branch
        %350 = sbr.rel (%p347) target = $region52
      $region51: #{tpu_custom_call.1} parent=5 // pred_region
        %s351 = ssub.s32 %s18, 1
        // Predicated region
        $region53: #{tpu_custom_call.1} parent=51 // pred_check
          %p352 = pneg %p60
        $region54: #{tpu_custom_call.1} parent=51 // pred_check_branch
          %354 = sbr.rel (%p352) target = $region56
        $region55: #{tpu_custom_call.1} parent=51 // pred_region
          %355 = dma.done [#allocation6], 128
        $region56: #{tpu_custom_call.1} parent=51 // pred_fallthru
          _
        // Predicated region
        $region57: #{tpu_custom_call.1} parent=51 // pred_check
          %p356 = pneg %p81
        $region58: #{tpu_custom_call.1} parent=51 // pred_check_branch
          %358 = sbr.rel (%p356) target = $region60
        $region59: #{tpu_custom_call.1} parent=51 // pred_region
          %359 = dma.done [#allocation9], 1024
        $region60: #{tpu_custom_call.1} parent=51 // pred_fallthru
          _
        %s360 = sand.u32 %s23, 1
        %s361 = scalar_lea.sflag [#allocation6], %s360
        %s362 = sand.u32 %s125, 1
        %s363 = smul.addr %s362, 64
        %s364 = scalar_lea.vmem [#allocation10], %s363
        // Predicated region
        $region61: #{tpu_custom_call.1} parent=51 // pred_check
          %p365 = pneg %p138
        $region62: #{tpu_custom_call.1} parent=51 // pred_check_branch
          %367 = sbr.rel (%p365) target = $region64
        $region63: #{tpu_custom_call.1} parent=51 // pred_region
          %368 = dma.done %s361, 1024
        $region64: #{tpu_custom_call.1} parent=51 // pred_fallthru
          _
        // Predicated region
        $region65: #{tpu_custom_call.1} parent=51 // pred_check
          %p369 = pneg %p195
        $region66: #{tpu_custom_call.1} parent=51 // pred_check_branch
          %371 = sbr.rel (%p369) target = $region68
        $region67: #{tpu_custom_call.1} parent=51 // pred_region
          %372 = dma.done [#allocation9], 1024
        $region68: #{tpu_custom_call.1} parent=51 // pred_fallthru
          _
        %p373 = pneg %p39
        %p374 = pneg %p36
        %p375 = pneg %p60
        %p376 = pneg %p57
        %p377 = pneg %p81
        %p378 = pneg %p78
        %p379 = pneg %p102
        %p380 = pneg %p99
        %s381 = sand.u32 %s23, 1
        %s382 = scalar_lea.sflag [#allocation6], %s381
        %s383 = sand.u32 %s125, 1
        %s384 = smul.addr %s383, 64
        %s385 = scalar_lea.vmem [#allocation10], %s384
        %p386 = pneg %p138
        %p387 = pneg %p135
        %s388 = ssub.s32 %s23, 1
        %p389 = scmp.gt.s32.totalorder %s388, 0
        %s390 = scalar_select %p389, %s388, 0
        %p391 = scmp.lt.s32.totalorder %s390, 0
        %s392 = scalar_select %p391, %s390, 0
        %p393 = scmp.lt.s32.totalorder %s392, 0
        %s394 = scalar_select %p393, %s392, 0
        %s395 = smul.addr %s394, 2
        %s396 = scalar_lea.vmem %s5, %s395
        %p397 = pneg %p174
        %p398 = pneg %p171
        %p399 = pneg %p195
        %p400 = pneg %p192
        %p401 = pneg %p216
        %p402 = pneg %p213
        %p403 = pneg %p237
        %p404 = pneg %p234
        %s405 = ssub.s32 %s23, 1
        %p406 = scmp.gt.s32.totalorder %s405, 0
        %s407 = scalar_select %p406, %s405, 0
        %p408 = scmp.lt.s32.totalorder %s407, 0
        %s409 = scalar_select %p408, %s407, 0
        %s410 = ssub.s32 %s23, 1
        %p411 = scmp.gt.s32.totalorder %s410, 0
        %s412 = scalar_select %p411, %s410, 0
        %p413 = scmp.lt.s32.totalorder %s412, 0
        %s414 = scalar_select %p413, %s412, 0
        %p415 = scmp.lt.s32.totalorder %s414, 0
        %s416 = scalar_select %p415, %s414, 0
        %s417 = smul.addr %s416, 2
        %s418 = scalar_lea.vmem %s5, %s417
        %s419 = ssub.s32 %s23, 1
        %p420 = scmp.gt.s32.totalorder %s419, 0
        %s421 = scalar_select %p420, %s419, 0
        %p422 = scmp.lt.s32.totalorder %s421, 0
        %s423 = scalar_select %p422, %s421, 0
        %s425 = sld [smem:[#allocation4]]
        %p426 = scmp.eq.s32.totalorder %s23, 0
        // Predicated region
        $region69: #{tpu_custom_call.1} parent=51 // pred_check
          %p427 = pneg %p426
        $region70: #{tpu_custom_call.1} parent=51 // pred_check_branch
          %429 = sbr.rel (%p427) target = $region72
        $region71: #{tpu_custom_call.1} parent=51 // pred_region
          %v430 = vld [vmem:[#allocation5] sm:$0xff]
          %v431 = vpack.c.bf16 %v430, %v430
          %v432 = vld [vmem:[#allocation8] sm:$0xf]
          %v433 = vld [vmem:[#allocation8 + $0x4] sm:$0xf]
          %v434 = vld [vmem:[#allocation8 + $0x8] sm:$0xf]
          %v435 = vld [vmem:[#allocation8 + $0xc] sm:$0xf]
          %v436 = vld [vmem:[#allocation8 + $0x10] sm:$0xf]
          %v437 = vld [vmem:[#allocation8 + $0x14] sm:$0xf]
          %v438 = vld [vmem:[#allocation8 + $0x18] sm:$0xf]
          %v439 = vld [vmem:[#allocation8 + $0x1c] sm:$0xf]
          %v440 = vld [vmem:[#allocation8 + $0x20] sm:$0xf]
          %v441 = vld [vmem:[#allocation8 + $0x24] sm:$0xf]
          %v442 = vld [vmem:[#allocation8 + $0x28] sm:$0xf]
          %v443 = vld [vmem:[#allocation8 + $0x2c] sm:$0xf]
          %v444 = vld [vmem:[#allocation8 + $0x30] sm:$0xf]
          %v445 = vld [vmem:[#allocation8 + $0x34] sm:$0xf]
          %v446 = vld [vmem:[#allocation8 + $0x38] sm:$0xf]
          %v447 = vld [vmem:[#allocation8 + $0x3c] sm:$0xf]
          %v464 = vunpack.c.l.b16 %v432
          %v465 = vunpack.c.l.b16 %v433
          %v466 = vunpack.c.l.b16 %v434
          %v467 = vunpack.c.l.b16 %v435
          %v468 = vunpack.c.l.b16 %v436
          %v469 = vunpack.c.l.b16 %v437
          %v470 = vunpack.c.l.b16 %v438
          %v471 = vunpack.c.l.b16 %v439
          %v472 = vunpack.c.l.b16 %v440
          %v473 = vunpack.c.l.b16 %v441
          %v474 = vunpack.c.l.b16 %v442
          %v475 = vunpack.c.l.b16 %v443
          %v476 = vunpack.c.l.b16 %v444
          %v477 = vunpack.c.l.b16 %v445
          %v478 = vunpack.c.l.b16 %v446
          %v479 = vunpack.c.l.b16 %v447
          %v480 = vpack.c.b16 %v465, %v464
          %v481 = vpack.c.b16 %v467, %v466
          %v482 = vpack.c.b16 %v469, %v468
          %v483 = vpack.c.b16 %v471, %v470
          %v484 = vpack.c.b16 %v473, %v472
          %v485 = vpack.c.b16 %v475, %v474
          %v486 = vpack.c.b16 %v477, %v476
          %v487 = vpack.c.b16 %v479, %v478
          %496 = vmatprep.subr.bf16.mxu0 0
          %497 = vmatpush1.bf16.msra.mxu0 %v480
          %498 = vmatprep.subr.bf16.mxu0 0
          %499 = vmatpush1.bf16.msra.mxu0 %v481
          %500 = vmatprep.subr.bf16.mxu0 0
          %501 = vmatpush1.bf16.msra.mxu0 %v482
          %502 = vmatprep.subr.bf16.mxu0 0
          %503 = vmatpush1.bf16.msra.mxu0 %v483
          %504 = vmatprep.subr.bf16.mxu0 0
          %505 = vmatpush1.bf16.msra.mxu0 %v484
          %506 = vmatprep.subr.bf16.mxu0 0
          %507 = vmatpush1.bf16.msra.mxu0 %v485
          %508 = vmatprep.subr.bf16.mxu0 0
          %509 = vmatpush1.bf16.msra.mxu0 %v486
          %510 = vmatprep.subr.bf16.mxu0 0
          %511 = vmatpush1.bf16.msra.mxu0 %v487
          %512 = vmatprep.subr.bf16.mxu0 0
          %513 = vmatpush1.bf16.msra.mxu0 0
          %514 = vmatprep.subr.bf16.mxu0 0
          %515 = vmatpush1.bf16.msra.mxu0 0
          %516 = vmatprep.subr.bf16.mxu0 0
          %517 = vmatpush1.bf16.msra.mxu0 0
          %518 = vmatprep.subr.bf16.mxu0 0
          %519 = vmatpush1.bf16.msra.mxu0 0
          %520 = vmatprep.subr.bf16.mxu0 0
          %521 = vmatpush1.bf16.msra.mxu0 0
          %522 = vmatprep.subr.bf16.mxu0 0
          %523 = vmatpush1.bf16.msra.mxu0 0
          %524 = vmatprep.subr.bf16.mxu0 0
          %525 = vmatpush1.bf16.msra.mxu0 0
          %526 = vmatprep.subr.bf16.mxu0 0
          %527 = vmatpush1.bf16.msra.mxu0 0
          %528 = vmatprep.mubr.bf16.mxu0 0
          %529 = vmatmul.mubr.bf16.gmra.mrb[0].mxu0 %v431
          %v530 = vpop.f32.mrb[0].mxu0
          %v531 = vadd.f32 0.0, %v530
          %v532 = vpop.f32.mrb[0].mxu0
          %v533 = vpop.f32.mrb[0].mxu0
          %v534 = vpop.f32.mrb[0].mxu0
          %535 = vdwg.mxu0
          %v536 = vld [vmem:[%s3] sm:$0x3]
          %v537 = vrot.slane %v531, 4
          %v538 = vadd.f32 %v531, %v537
          %v539 = vrot.slane %v538, 2
          %v540 = vadd.f32 %v538, %v539
          %v541 = vrot.slane %v540, 1
          %v542 = vadd.f32 %v540, %v541
          %v543 = vmul.f32 %v531, %v531
          %v544 = vrot.slane %v543, 4
          %v545 = vadd.f32 %v543, %v544
          %v546 = vrot.slane %v545, 2
          %v547 = vadd.f32 %v545, %v546
          %v548 = vrot.slane %v547, 1
          %v549 = vadd.f32 %v547, %v548
          %v550 = vmul.f32 %v542, 0.125
          %v551 = vmul.f32 %v549, 0.125
          %v552 = vmul.f32 %v550, %v550
          %v553 = vsub.f32 %v551, %v552
          %v554 = vmax.f32 %v553, 0.0
          %v555 = vadd.f32 %v554, 1e-05
          %v556 = vrsqrt.pop %v555
          %v557 = vmul.f32 %v536, %v556
          %v558 = vmul.f32 %v550, %v557
          %v560 = vrot.slane %v558, 7
          %v562 = vsub.f32 %v536, %v560
          %v563 = vlaneseq
          %v564 = vshrl.u32 %v563, 7
          %v565 = vsub.s32 0, %v564
          %v566 = vrot.slane %v557, %v565
          %v567 = vmul.f32 %v531, %v566
          %v568 = vlaneseq
          %v569 = vshrl.u32 %v568, 7
          %v570 = vsub.s32 1, %v569
          %v571 = vrot.slane %v562, %v570
          %v572 = vadd.f32 %v567, %v571
          %573 = vst [vmem:[#allocation2] sm:$0xff] %v572
          %574 = vst [vmem:[#allocation3] sm:$0xff] %v572
        $region72: #{tpu_custom_call.1} parent=51 // pred_fallthru
          _
        %p575 = scmp.gt.s32.totalorder %s23, 0
        %p576 = scmp.lt.s32.totalorder %s23, 2
        %p577 = pnand %p575, %p576
        %p578 = pneg %p577
        // Predicated region
        $region73: #{tpu_custom_call.1} parent=51 // pred_check
          _
        $region74: #{tpu_custom_call.1} parent=51 // pred_check_branch
          %580 = sbr.rel (%p577) target = $region76
        $region75: #{tpu_custom_call.1} parent=51 // pred_region
          %v581 = vld [vmem:[#allocation2] sm:$0xff]
          %v582 = vstv %s425
          %v583 = vmul.f32 %v582, %v581
          %v584 = vmax.f32 %v581, %v583
          %v585 = vmul.f32 %v584, 0.5
          %v586 = vld [vmem:[#allocation3] sm:$0xff]
          %v587 = vmul.f32 %v586, 0.5
          %v588 = vadd.f32 %v585, %v587
          %v589 = vpack.c.bf16 %v588, %v588
          %v590 = vld [vmem:[%s364] sm:$0xf]
          %v591 = vld [vmem:[%s364 + $0x4] sm:$0xf]
          %v592 = vld [vmem:[%s364 + $0x8] sm:$0xf]
          %v593 = vld [vmem:[%s364 + $0xc] sm:$0xf]
          %v594 = vld [vmem:[%s364 + $0x10] sm:$0xf]
          %v595 = vld [vmem:[%s364 + $0x14] sm:$0xf]
          %v596 = vld [vmem:[%s364 + $0x18] sm:$0xf]
          %v597 = vld [vmem:[%s364 + $0x1c] sm:$0xf]
          %v598 = vld [vmem:[%s364 + $0x20] sm:$0xf]
          %v599 = vld [vmem:[%s364 + $0x24] sm:$0xf]
          %v600 = vld [vmem:[%s364 + $0x28] sm:$0xf]
          %v601 = vld [vmem:[%s364 + $0x2c] sm:$0xf]
          %v602 = vld [vmem:[%s364 + $0x30] sm:$0xf]
          %v603 = vld [vmem:[%s364 + $0x34] sm:$0xf]
          %v604 = vld [vmem:[%s364 + $0x38] sm:$0xf]
          %v605 = vld [vmem:[%s364 + $0x3c] sm:$0xf]
          %v622 = vunpack.c.l.b16 %v590
          %v623 = vunpack.c.l.b16 %v591
          %v624 = vunpack.c.l.b16 %v592
          %v625 = vunpack.c.l.b16 %v593
          %v626 = vunpack.c.l.b16 %v594
          %v627 = vunpack.c.l.b16 %v595
          %v628 = vunpack.c.l.b16 %v596
          %v629 = vunpack.c.l.b16 %v597
          %v630 = vunpack.c.l.b16 %v598
          %v631 = vunpack.c.l.b16 %v599
          %v632 = vunpack.c.l.b16 %v600
          %v633 = vunpack.c.l.b16 %v601
          %v634 = vunpack.c.l.b16 %v602
          %v635 = vunpack.c.l.b16 %v603
          %v636 = vunpack.c.l.b16 %v604
          %v637 = vunpack.c.l.b16 %v605
          %v638 = vpack.c.b16 %v623, %v622
          %v639 = vpack.c.b16 %v625, %v624
          %v640 = vpack.c.b16 %v627, %v626
          %v641 = vpack.c.b16 %v629, %v628
          %v642 = vpack.c.b16 %v631, %v630
          %v643 = vpack.c.b16 %v633, %v632
          %v644 = vpack.c.b16 %v635, %v634
          %v645 = vpack.c.b16 %v637, %v636
          %654 = vmatprep.subr.bf16.mxu0 0
          %655 = vmatpush1.bf16.msra.mxu0 %v638
          %656 = vmatprep.subr.bf16.mxu0 0
          %657 = vmatpush1.bf16.msra.mxu0 %v639
          %658 = vmatprep.subr.bf16.mxu0 0
          %659 = vmatpush1.bf16.msra.mxu0 %v640
          %660 = vmatprep.subr.bf16.mxu0 0
          %661 = vmatpush1.bf16.msra.mxu0 %v641
          %662 = vmatprep.subr.bf16.mxu0 0
          %663 = vmatpush1.bf16.msra.mxu0 %v642
          %664 = vmatprep.subr.bf16.mxu0 0
          %665 = vmatpush1.bf16.msra.mxu0 %v643
          %666 = vmatprep.subr.bf16.mxu0 0
          %667 = vmatpush1.bf16.msra.mxu0 %v644
          %668 = vmatprep.subr.bf16.mxu0 0
          %669 = vmatpush1.bf16.msra.mxu0 %v645
          %670 = vmatprep.subr.bf16.mxu0 0
          %671 = vmatpush1.bf16.msra.mxu0 0
          %672 = vmatprep.subr.bf16.mxu0 0
          %673 = vmatpush1.bf16.msra.mxu0 0
          %674 = vmatprep.subr.bf16.mxu0 0
          %675 = vmatpush1.bf16.msra.mxu0 0
          %676 = vmatprep.subr.bf16.mxu0 0
          %677 = vmatpush1.bf16.msra.mxu0 0
          %678 = vmatprep.subr.bf16.mxu0 0
          %679 = vmatpush1.bf16.msra.mxu0 0
          %680 = vmatprep.subr.bf16.mxu0 0
          %681 = vmatpush1.bf16.msra.mxu0 0
          %682 = vmatprep.subr.bf16.mxu0 0
          %683 = vmatpush1.bf16.msra.mxu0 0
          %684 = vmatprep.subr.bf16.mxu0 0
          %685 = vmatpush1.bf16.msra.mxu0 0
          %686 = vmatprep.mubr.bf16.mxu0 0
          %687 = vmatmul.mubr.bf16.gmra.mrb[0].mxu0 %v589
          %v688 = vpop.f32.mrb[0].mxu0
          %v689 = vadd.f32 0.0, %v688
          %v690 = vpop.f32.mrb[0].mxu0
          %v691 = vpop.f32.mrb[0].mxu0
          %v692 = vpop.f32.mrb[0].mxu0
          %693 = vdwg.mxu0
          %v694 = vld [vmem:[%s418] sm:$0x3]
          %v695 = vrot.slane %v689, 4
          %v696 = vadd.f32 %v689, %v695
          %v697 = vrot.slane %v696, 2
          %v698 = vadd.f32 %v696, %v697
          %v699 = vrot.slane %v698, 1
          %v700 = vadd.f32 %v698, %v699
          %v701 = vmul.f32 %v689, %v689
          %v702 = vrot.slane %v701, 4
          %v703 = vadd.f32 %v701, %v702
          %v704 = vrot.slane %v703, 2
          %v705 = vadd.f32 %v703, %v704
          %v706 = vrot.slane %v705, 1
          %v707 = vadd.f32 %v705, %v706
          %v708 = vmul.f32 %v700, 0.125
          %v709 = vmul.f32 %v707, 0.125
          %v710 = vmul.f32 %v708, %v708
          %v711 = vsub.f32 %v709, %v710
          %v712 = vmax.f32 %v711, 0.0
          %v713 = vadd.f32 %v712, 1e-05
          %v714 = vrsqrt.pop %v713
          %v715 = vmul.f32 %v694, %v714
          %v716 = vmul.f32 %v708, %v715
          %v718 = vrot.slane %v716, 7
          %v720 = vsub.f32 %v694, %v718
          %v721 = vlaneseq
          %v722 = vshrl.u32 %v721, 7
          %v723 = vsub.s32 0, %v722
          %v724 = vrot.slane %v715, %v723
          %v725 = vmul.f32 %v689, %v724
          %v726 = vlaneseq
          %v727 = vshrl.u32 %v726, 7
          %v728 = vsub.s32 1, %v727
          %v729 = vrot.slane %v720, %v728
          %v730 = vadd.f32 %v725, %v729
          %v731 = vadd.f32 %v730, %v584
          %732 = vst [vmem:[#allocation2] sm:$0xff] %v731
        $region76: #{tpu_custom_call.1} parent=51 // pred_fallthru
          _
        %p733 = scmp.eq.s32.totalorder %s23, 2
        // Predicated region
        $region77: #{tpu_custom_call.1} parent=51 // pred_check
          %p734 = pneg %p733
        $region78: #{tpu_custom_call.1} parent=51 // pred_check_branch
          %736 = sbr.rel (%p734) target = $region80
        $region79: #{tpu_custom_call.1} parent=51 // pred_region
          %v737 = vld [vmem:[#allocation2] sm:$0xff]
          %v738 = vstv %s425
          %v739 = vmul.f32 %v738, %v737
          %v740 = vmax.f32 %v737, %v739
          %v741 = vpack.c.bf16 %v740, %v740
          %v742 = vld [vmem:[#allocation11] sm:$0xf]
          %v743 = vld [vmem:[#allocation11 + $0x4] sm:$0xf]
          %v744 = vld [vmem:[#allocation11 + $0x8] sm:$0xf]
          %v745 = vld [vmem:[#allocation11 + $0xc] sm:$0xf]
          %v746 = vld [vmem:[#allocation11 + $0x10] sm:$0xf]
          %v747 = vld [vmem:[#allocation11 + $0x14] sm:$0xf]
          %v748 = vld [vmem:[#allocation11 + $0x18] sm:$0xf]
          %v749 = vld [vmem:[#allocation11 + $0x1c] sm:$0xf]
          %v750 = vld [vmem:[#allocation11 + $0x20] sm:$0xf]
          %v751 = vld [vmem:[#allocation11 + $0x24] sm:$0xf]
          %v752 = vld [vmem:[#allocation11 + $0x28] sm:$0xf]
          %v753 = vld [vmem:[#allocation11 + $0x2c] sm:$0xf]
          %v754 = vld [vmem:[#allocation11 + $0x30] sm:$0xf]
          %v755 = vld [vmem:[#allocation11 + $0x34] sm:$0xf]
          %v756 = vld [vmem:[#allocation11 + $0x38] sm:$0xf]
          %v757 = vld [vmem:[#allocation11 + $0x3c] sm:$0xf]
          %v774 = vunpack.c.l.b16 %v742
          %v775 = vunpack.c.l.b16 %v743
          %v776 = vunpack.c.l.b16 %v744
          %v777 = vunpack.c.l.b16 %v745
          %v778 = vunpack.c.l.b16 %v746
          %v779 = vunpack.c.l.b16 %v747
          %v780 = vunpack.c.l.b16 %v748
          %v781 = vunpack.c.l.b16 %v749
          %v782 = vunpack.c.l.b16 %v750
          %v783 = vunpack.c.l.b16 %v751
          %v784 = vunpack.c.l.b16 %v752
          %v785 = vunpack.c.l.b16 %v753
          %v786 = vunpack.c.l.b16 %v754
          %v787 = vunpack.c.l.b16 %v755
          %v788 = vunpack.c.l.b16 %v756
          %v789 = vunpack.c.l.b16 %v757
          %v790 = vpack.c.b16 %v775, %v774
          %v791 = vpack.c.b16 %v777, %v776
          %v792 = vpack.c.b16 %v779, %v778
          %v793 = vpack.c.b16 %v781, %v780
          %v794 = vpack.c.b16 %v783, %v782
          %v795 = vpack.c.b16 %v785, %v784
          %v796 = vpack.c.b16 %v787, %v786
          %v797 = vpack.c.b16 %v789, %v788
          %806 = vmatprep.subr.bf16.mxu0 0
          %807 = vmatpush1.bf16.msra.mxu0 %v790
          %808 = vmatprep.subr.bf16.mxu0 0
          %809 = vmatpush1.bf16.msra.mxu0 %v791
          %810 = vmatprep.subr.bf16.mxu0 0
          %811 = vmatpush1.bf16.msra.mxu0 %v792
          %812 = vmatprep.subr.bf16.mxu0 0
          %813 = vmatpush1.bf16.msra.mxu0 %v793
          %814 = vmatprep.subr.bf16.mxu0 0
          %815 = vmatpush1.bf16.msra.mxu0 %v794
          %816 = vmatprep.subr.bf16.mxu0 0
          %817 = vmatpush1.bf16.msra.mxu0 %v795
          %818 = vmatprep.subr.bf16.mxu0 0
          %819 = vmatpush1.bf16.msra.mxu0 %v796
          %820 = vmatprep.subr.bf16.mxu0 0
          %821 = vmatpush1.bf16.msra.mxu0 %v797
          %822 = vmatprep.subr.bf16.mxu0 0
          %823 = vmatpush1.bf16.msra.mxu0 0
          %824 = vmatprep.subr.bf16.mxu0 0
          %825 = vmatpush1.bf16.msra.mxu0 0
          %826 = vmatprep.subr.bf16.mxu0 0
          %827 = vmatpush1.bf16.msra.mxu0 0
          %828 = vmatprep.subr.bf16.mxu0 0
          %829 = vmatpush1.bf16.msra.mxu0 0
          %830 = vmatprep.subr.bf16.mxu0 0
          %831 = vmatpush1.bf16.msra.mxu0 0
          %832 = vmatprep.subr.bf16.mxu0 0
          %833 = vmatpush1.bf16.msra.mxu0 0
          %834 = vmatprep.subr.bf16.mxu0 0
          %835 = vmatpush1.bf16.msra.mxu0 0
          %836 = vmatprep.subr.bf16.mxu0 0
          %837 = vmatpush1.bf16.msra.mxu0 0
          %838 = vmatprep.mubr.bf16.mxu0 0
          %839 = vmatmul.mubr.bf16.gmra.mrb[0].mxu0 %v741
          %v840 = vpop.f32.mrb[0].mxu0
          %v841 = vadd.f32 0.0, %v840
          %v842 = vpop.f32.mrb[0].mxu0
          %v843 = vpop.f32.mrb[0].mxu0
          %v844 = vpop.f32.mrb[0].mxu0
          %845 = vdwg.mxu0
          %v846 = vld [vmem:[%s7] sm:$0x3]
          %v847 = vrot.slane %v841, 4
          %v848 = vadd.f32 %v841, %v847
          %v849 = vrot.slane %v848, 2
          %v850 = vadd.f32 %v848, %v849
          %v851 = vrot.slane %v850, 1
          %v852 = vadd.f32 %v850, %v851
          %v853 = vmul.f32 %v841, %v841
          %v854 = vrot.slane %v853, 4
          %v855 = vadd.f32 %v853, %v854
          %v856 = vrot.slane %v855, 2
          %v857 = vadd.f32 %v855, %v856
          %v858 = vrot.slane %v857, 1
          %v859 = vadd.f32 %v857, %v858
          %v860 = vmul.f32 %v852, 0.125
          %v861 = vmul.f32 %v859, 0.125
          %v862 = vmul.f32 %v860, %v860
          %v863 = vsub.f32 %v861, %v862
          %v864 = vmax.f32 %v863, 0.0
          %v865 = vadd.f32 %v864, 1e-05
          %v866 = vrsqrt.pop %v865
          %v867 = vmul.f32 %v846, %v866
          %v868 = vmul.f32 %v860, %v867
          %v870 = vrot.slane %v868, 7
          %v872 = vsub.f32 %v846, %v870
          %v873 = vlaneseq
          %v874 = vshrl.u32 %v873, 7
          %v875 = vsub.s32 0, %v874
          %v876 = vrot.slane %v867, %v875
          %v877 = vmul.f32 %v841, %v876
          %v878 = vlaneseq
          %v879 = vshrl.u32 %v878, 7
          %v880 = vsub.s32 1, %v879
          %v881 = vrot.slane %v872, %v880
          %v882 = vadd.f32 %v877, %v881
          %883 = vst [vmem:[#allocation12] sm:$0xff] %v882
        $region80: #{tpu_custom_call.1} parent=51 // pred_fallthru
          _
        // Predicated region
        $region81: #{tpu_custom_call.1} parent=51 // pred_check
          %p884 = pneg %p234
        $region82: #{tpu_custom_call.1} parent=51 // pred_check_branch
          %886 = sbr.rel (%p884) target = $region84
        $region83: #{tpu_custom_call.1} parent=51 // pred_region
          %s888 = ssub.s32 128, 128
          %889 = vsyncadd [#allocation7], %s888
          %s891 = sshll.u32 [#allocation12], 4
          %s892 = int_to_ptr.vmem [resolvable:$true] %s891
          %894 = dma.vmem_to_hbm [thread:$0]  %s892, 128, %s8, [#allocation7]
        $region84: #{tpu_custom_call.1} parent=51 // pred_fallthru
          _
        // Predicated region
        $region85: #{tpu_custom_call.1} parent=51 // pred_check
          %p895 = pneg %p234
        $region86: #{tpu_custom_call.1} parent=51 // pred_check_branch
          %897 = sbr.rel (%p895) target = $region88
        $region87: #{tpu_custom_call.1} parent=51 // pred_region
          %898 = dma.done [#allocation7], 128
        $region88: #{tpu_custom_call.1} parent=51 // pred_fallthru
          _
      $region52: #{tpu_custom_call.1} parent=5 // pred_fallthru
        _
      %p899 = scmp.le.s32.totalorder 2, %s18
      // Predicated region
      $region89: #{tpu_custom_call.1} parent=5 // pred_check
        %p900 = pneg %p899
      $region90: #{tpu_custom_call.1} parent=5 // pred_check_branch
        %902 = sbr.rel (%p900) target = $region92
      $region91: #{tpu_custom_call.1} parent=5 // pred_region
        %s903 = ssub.s32 %s18, 2
      $region92: #{tpu_custom_call.1} parent=5 // pred_fallthru
        _
    $region6: #{tpu_custom_call.1} parent=1 // loop_footer
      %s22 = sadd.s32 1, %s18
    $region7: #{tpu_custom_call.1} parent=1 // loop_footer_branch
      %17 = sbr.rel target = $region3
    $region8: #{tpu_custom_call.1} parent=1 // loop_exit
      _
    %904 = vsyncpa [#allocation6], 1
    %s905 = scalar_lea.sflag [#allocation6], 1
    %906 = vsyncpa %s905, 1
    %907 = vsyncpa [#allocation9], 1
    %908 = vsyncpa [#allocation7], 1
    %s909 = scalar_lea.sflag [#allocation7], 1
    %910 = vsyncpa %s909, 1

</llo_original>
